<compile_context>
chip_gen: v7x
topology: tpu7x:2x2x1
jax: 0.10.0
libtpu: 0.0.40
codegen_flags: <defaults>
</compile_context>

<pallas_src>
import jax
import jax.numpy as jnp
from jax.experimental import pallas as pl
from jax.experimental.pallas import tpu as pltpu


def _round_up(x, m):
    return ((x + m - 1) // m) * m


def _discriminator_kernel(x_ref, w1_ref, b1_ref, w2_ref, b2_ref, o_ref):
    # x_ref : (TB, IN)   compute dtype (bf16 by default)
    # w1_ref: (IN, HID)  compute dtype (resident across the grid)
    # b1_ref: (1, HID)   f32
    # w2_ref: (1, HID)   f32  (second-layer weights as a lane-dense row)
    # b2_ref: (1, 1)     f32  (SMEM scalar)
    # o_ref : (TB, 1)    f32
    h = jnp.dot(x_ref[...], w1_ref[...], preferred_element_type=jnp.float32)
    h = jnp.maximum(h + b1_ref[...], 0.0)                      # bias + ReLU on VPU
    # Second linear (out_features == 1): VPU multiply + lane reduction instead of
    # an N=1 MXU matmul; f32 accumulation throughout.
    y = jnp.sum(h * w2_ref[...], axis=-1, keepdims=True) + b2_ref[0, 0]
    o_ref[...] = y.astype(o_ref.dtype)


def domain_discriminator(x, w1, b1, w2, b2, *, tile_b=None,
                         compute_dtype=jnp.bfloat16):
    """x: (B, in_dim). w1: (in_dim, hidden). b1: (hidden,). w2: (hidden, 1).
    b2: scalar-like. Returns (B, 1) f32 logits (pre-sigmoid)."""
    B, in_dim = x.shape
    hidden = w1.shape[1]

    itemsize = jnp.dtype(compute_dtype).itemsize
    if tile_b is None:
        # VMEM budget per tile: double-buffered x tile + f32 hidden activations.
        per_row = 2 * in_dim * itemsize + hidden * 4
        cap = max(16, (12 * 1024 * 1024) // per_row)
        tile_b = int(min(512, cap, _round_up(B, 16)))
    # Multiple of 16 keeps bf16 sublane packing and f32 (8,_) tiling happy.
    tile_b = max(16, _round_up(int(tile_b), 16))

    # Pad the batch so the big-tile fast path works for any B (tail is masked
    # off by slicing the result).
    Bp = _round_up(B, tile_b)
    xp = x if Bp == B else jnp.pad(x, ((0, Bp - B), (0, 0)))
    xp = xp.astype(compute_dtype)
    w1c = w1.astype(compute_dtype)
    b1r = jnp.asarray(b1, jnp.float32).reshape(1, hidden)
    w2r = jnp.asarray(w2, jnp.float32).reshape(1, hidden)   # lane-dense row
    b2s = jnp.asarray(b2, jnp.float32).reshape(1, 1)

    grid = (Bp // tile_b,)
    out = pl.pallas_call(
        _discriminator_kernel,
        out_shape=jax.ShapeDtypeStruct((Bp, 1), jnp.float32),
        grid_spec=pltpu.PrefetchScalarGridSpec(
            num_scalar_prefetch=0,
            grid=grid,
            in_specs=[
                pl.BlockSpec((tile_b, in_dim), lambda i: (i, 0)),   # x tile (streamed)
                pl.BlockSpec((in_dim, hidden), lambda i: (0, 0)),   # W1 (resident)
                pl.BlockSpec((1, hidden), lambda i: (0, 0)),        # b1 (resident)
                pl.BlockSpec((1, hidden), lambda i: (0, 0)),        # w2 row (resident)
                pl.BlockSpec(memory_space=pltpu.MemorySpace.SMEM),  # b2 scalar
            ],
            # Output traffic is ~1/in_dim of the x stream, and (tile_b, 1) blocks
            # of a (Bp, 1) array are contiguous in HBM, so the column layout is
            # not the bottleneck here.
            out_specs=pl.BlockSpec((tile_b, 1), lambda i: (i, 0)),
        ),
        compiler_params=pltpu.CompilerParams(
            dimension_semantics=("parallel",),
            vmem_limit_bytes=48 * 1024 * 1024,
        ),
    )(xp, w1c, b1r, w2r, b2s)
    return out[:B]


if __name__ == "__main__":
    # Small shapes consistent with the module's (batch, in_dim) -> (batch, 1).
    B, IN_DIM, HIDDEN = 48, 256, 128

    key = jax.random.PRNGKey(0)
    kx, k1, k2, k3, k4 = jax.random.split(key, 5)
    x = jax.random.normal(kx, (B, IN_DIM), jnp.float32)
    bound1 = 1.0 / jnp.sqrt(IN_DIM)
    bound2 = 1.0 / jnp.sqrt(HIDDEN)
    w1 = jax.random.uniform(k1, (IN_DIM, HIDDEN), jnp.float32, -bound1, bound1)
    b1 = jax.random.uniform(k2, (HIDDEN,), jnp.float32, -bound1, bound1)
    w2 = jax.random.uniform(k3, (HIDDEN, 1), jnp.float32, -bound2, bound2)
    b2 = jax.random.uniform(k4, (1,), jnp.float32, -bound2, bound2)

    # Pure-JAX reference (same math as the PyTorch forward).
    h_ref = jnp.maximum(x @ w1 + b1[None, :], 0.0)
    ref = jnp.sum(h_ref * w2.reshape(1, -1), axis=-1, keepdims=True) + b2.reshape(1, 1)

    # f32 path: exercises padding (B=48 -> 64) and a 2-step parallel grid.
    out_f32 = jax.block_until_ready(
        domain_discriminator(x, w1, b1, w2, b2, tile_b=32,
                             compute_dtype=jnp.float32))
    assert out_f32.shape == (B, 1)
    assert jnp.allclose(out_f32, ref, atol=1e-4, rtol=1e-4)

    # Default fast path: bf16 x/W1 stream with f32 accumulation.
    out_bf16 = jax.block_until_ready(domain_discriminator(x, w1, b1, w2, b2))
    assert out_bf16.shape == (B, 1)
    assert jnp.allclose(out_bf16, ref, atol=3e-2, rtol=3e-2)

    print("KERNEL_OK")
</pallas_src>

<mosaic_0001>
module attributes {stable_mosaic.version = 11 : i64} {
  func.func @_discriminator_kernel(%arg0: i32, %arg1: memref<32x256xf32, #tpu.memory_space<vmem>>, %arg2: memref<256x128xf32, #tpu.memory_space<vmem>>, %arg3: memref<1x128xf32, #tpu.memory_space<vmem>>, %arg4: memref<1x128xf32, #tpu.memory_space<vmem>>, %arg5: memref<1x1xf32, #tpu.memory_space<smem>>, %arg6: memref<32x1xf32, #tpu.memory_space<vmem>>) attributes {dimension_semantics = [#tpu.dimension_semantics<parallel>], iteration_bounds = array<i64: 2>, scalar_prefetch = 0 : i64, scratch_operands = 0 : i64, tpu.core_type = #tpu.core_type<tc>, window_params = [{transform_indices = @transform_0, window_bounds = array<i64: 32, 256>}, {pipeline_mode = #tpu.pipeline_mode<synchronous>, transform_indices = @transform_1, window_bounds = array<i64: 256, 128>}, {pipeline_mode = #tpu.pipeline_mode<synchronous>, transform_indices = @transform_2, window_bounds = array<i64: 1, 128>}, {pipeline_mode = #tpu.pipeline_mode<synchronous>, transform_indices = @transform_3, window_bounds = array<i64: 1, 128>}, {transform_indices = @transform_4, window_bounds = array<i64: 1, 1>}, {transform_indices = @transform_5, window_bounds = array<i64: 32, 1>}]} {
    %c0 = arith.constant 0 : index
    %c0_0 = arith.constant 0 : index
    %0 = vector.load %arg1[%c0, %c0_0] : memref<32x256xf32, #tpu.memory_space<vmem>>, vector<32x256xf32>
    %c0_1 = arith.constant 0 : index
    %c0_2 = arith.constant 0 : index
    %1 = vector.load %arg2[%c0_1, %c0_2] : memref<256x128xf32, #tpu.memory_space<vmem>>, vector<256x128xf32>
    %cst = arith.constant dense<0.000000e+00> : vector<32x128xf32>
    %2 = tpu.matmul %0, %1, %cst {dimension_numbers = #tpu.dot_dimension_numbers<[1], [0], [0], [1], [0, 0, 1, 1], [], []>} : vector<32x256xf32>, vector<256x128xf32>, vector<32x128xf32> -> vector<32x128xf32>
    %c0_3 = arith.constant 0 : index
    %c0_4 = arith.constant 0 : index
    %3 = vector.load %arg3[%c0_3, %c0_4] : memref<1x128xf32, #tpu.memory_space<vmem>>, vector<1x128xf32>
    %4 = vector.broadcast %3 : vector<1x128xf32> to vector<32x128xf32>
    %5 = arith.addf %2, %4 : vector<32x128xf32>
    %cst_5 = arith.constant 0.000000e+00 : f32
    %6 = vector.broadcast %cst_5 : f32 to vector<32x128xf32>
    %7 = arith.maximumf %5, %6 : vector<32x128xf32>
    %c0_6 = arith.constant 0 : index
    %c0_7 = arith.constant 0 : index
    %8 = vector.load %arg4[%c0_6, %c0_7] : memref<1x128xf32, #tpu.memory_space<vmem>>, vector<1x128xf32>
    %9 = vector.broadcast %8 : vector<1x128xf32> to vector<32x128xf32>
    %10 = arith.mulf %7, %9 : vector<32x128xf32>
    %cst_8 = arith.constant dense<0.000000e+00> : vector<32xf32>
    %11 = vector.multi_reduction <add>, %10, %cst_8 [1] : vector<32x128xf32> to vector<32xf32>
    %12 = vector.shape_cast %11 : vector<32xf32> to vector<32x1xf32>
    %c0_9 = arith.constant 0 : index
    %c0_10 = arith.constant 0 : index
    %13 = memref.load %arg5[%c0_9, %c0_10] : memref<1x1xf32, #tpu.memory_space<smem>>
    %14 = vector.broadcast %13 : f32 to vector<32x1xf32>
    %15 = arith.addf %12, %14 : vector<32x1xf32>
    %c0_11 = arith.constant 0 : index
    %c0_12 = arith.constant 0 : index
    %16 = vector.load %arg6[%c0_11, %c0_12] : memref<32x1xf32, #tpu.memory_space<vmem>>, vector<32x1xf32>
    tpu.vector_store %arg6[%c0_11, %c0_12], %15 {strides = array<i32>} : memref<32x1xf32, #tpu.memory_space<vmem>>, vector<32x1xf32>,
    return
  }
  func.func @transform_0(%arg0: i32) -> (i32, i32) {
    %c0_i32 = arith.constant 0 : i32
    %c0_i32_0 = arith.constant 0 : i32
    return %arg0, %c0_i32 : i32, i32
  }
  func.func @transform_1(%arg0: i32) -> (i32, i32) {
    %c0_i32 = arith.constant 0 : i32
    %c0_i32_0 = arith.constant 0 : i32
    %c0_i32_1 = arith.constant 0 : i32
    return %c0_i32, %c0_i32_0 : i32, i32
  }
  func.func @transform_2(%arg0: i32) -> (i32, i32) {
    %c0_i32 = arith.constant 0 : i32
    %c0_i32_0 = arith.constant 0 : i32
    %c0_i32_1 = arith.constant 0 : i32
    return %c0_i32, %c0_i32_0 : i32, i32
  }
  func.func @transform_3(%arg0: i32) -> (i32, i32) {
    %c0_i32 = arith.constant 0 : i32
    %c0_i32_0 = arith.constant 0 : i32
    %c0_i32_1 = arith.constant 0 : i32
    return %c0_i32, %c0_i32_0 : i32, i32
  }
  func.func @transform_4(%arg0: i32) -> (i32, i32) {
    %c0_i32 = arith.constant 0 : i32
    %c0_i32_0 = arith.constant 0 : i32
    %c0_i32_1 = arith.constant 0 : i32
    return %c0_i32, %c0_i32_0 : i32, i32
  }
  func.func @transform_5(%arg0: i32) -> (i32, i32) {
    %c0_i32 = arith.constant 0 : i32
    %c0_i32_0 = arith.constant 0 : i32
    return %arg0, %c0_i32 : i32, i32
  }
}

</mosaic_0001>

<llo_original>
// kernel: tpu_custom_call.1
$region0: #{tpu_custom_call.1}
  #allocation0 [shape = 'u32[]', space=smem, size = 0x4, offset = 0x4, fixed_abs, tag = 'smem constant byte address 0x4 - core index']
  #allocation1 [shape = 'u32[144,128]{1,0:T(1,128)}', space=vmem, size = 0x12000, scoped, tag = 'internal scratch']
  #allocation2 [shape = 'f32[1,1]{1,0:T(1,128)S(6)}', space=smem, size = 0x200, scoped, tag = 'scoped memory for tpu_custom_call.1']
  %s0 = inlined_call_operand.hbm [shape: f32[64,256], index: 0, kind: input, shape index: {}]
  %s1 = inlined_call_operand.hbm [shape: f32[256,128], index: 1, kind: input, shape index: {}]
  %s2 = inlined_call_operand.vmem [shape: f32[1,128], index: 2, kind: input, shape index: {}]
  %s3 = inlined_call_operand.vmem [shape: f32[1,128], index: 3, kind: input, shape index: {}]
  %s4 = inlined_call_operand.<no memory space> [shape: f32[1,1], index: 4, kind: input, shape index: {}]
  %s5 = inlined_call_operand.vmem [shape: f32[64,1], index: 5, kind: output, shape index: {}]
  %s6 = sld [smem:[#allocation0]]
  $region61: #{tpu_custom_call.1} parent=0
    _
  %s8 = ssub.s32 1, %s6
  %s9 = scalar_select 0, %s8, %s6
  %10 = sst [smem:[#allocation2]] %s4
  $region1: #{tpu_custom_call.1} parent=0
    #allocation3 [shape = 'u8[65536]{0}', space=vmem, size = 0x10000, scoped, tag = 'input window, operand 0']
    #allocation4 [shape = 's32[2]{0}', space=sflag, size = 0x8, scoped, tag = 'scoped memory for tpu_custom_call.1']
    #allocation5 [shape = 'u8[131072]{0}', space=vmem, size = 0x20000, scoped, tag = 'input window, operand 1, single buffered']
    #allocation6 [shape = 's32[1]{0}', space=sflag, size = 0x4, scoped, tag = 'scoped memory for tpu_custom_call.1']
    %11 = vsyncpa [#allocation4], 0
    %s12 = scalar_lea.sflag [#allocation4], 1
    %13 = vsyncpa %s12, 0
    %14 = vsyncpa [#allocation6], 0
    loop: start=0, step=1, limit=4
    $region2: #{tpu_custom_call.1} parent=1 // loop_pre_header
      _
    $region3: #{tpu_custom_call.1} parent=1 // loop_header
      %s16 = sphi 0, %s20
      %p17 = scmp.ge.s32.totalorder %s16, 4
      %s26 = sphi 0, %s28
      %s29 = sphi 0, %s26
      %s30 = sphi 0, %s29
      %s46 = sphi 0, %s30
      %s50 = sphi 0, %s50
      %s52 = sphi 0, %s50
      %s53 = sphi 0, %s52
      %s67 = sphi 0, %s53
      %s71 = sphi 0, %s71
      %s73 = sphi 0, %s71
      %s74 = sphi 0, %s73
      %s88 = sphi 0, %s74
      %s92 = sphi 0, %s92
      %s94 = sphi 0, %s92
      %s95 = sphi 0, %s94
      %s109 = sphi 0, %s95
      %s113 = sphi 0, %s113
      %s115 = sphi 0, %s113
      %s116 = sphi 0, %s115
      %s130 = sphi 0, %s116
      %s136 = sphi 0, %s138
      %s139 = sphi 0, %s136
      %s140 = sphi 0, %s139
      %s156 = sphi 0, %s140
    $region4: #{tpu_custom_call.1} parent=1 // loop_header_branch
      %19 = sbr.rel (%p17) target = $region8
    $region5: #{tpu_custom_call.1} parent=1 // loop_body
      %s21 = ssub.s32 %s16, 1
      %s22 = ssub.s32 %s16, 2
      %s23 = sadd.s32 %s16, 1
      %s24 = ssub.s32 %s16, %s23
      %p25 = scmp.eq.s32.totalorder %s24, 0
      %s27 = sadd.s32 %s26, 1
      %s28 = scalar_select %p25, %s26, %s27
      %p31 = pneg %p25
      %p32 = scmp.eq.s32.totalorder %s16, 1
      %p33 = por %p31, %p32
      %p34 = scmp.ne.s32.totalorder %s26, %s29
      %p35 = scmp.eq.s32.totalorder %s16, 0
      %p36 = por %p34, %p35
      %p37 = scmp.ne.s32.totalorder %s26, %s29
      %p38 = scmp.eq.s32.totalorder %s21, 1
      %p39 = por %p37, %p38
      %p40 = scmp.ne.s32.totalorder %s29, %s30
      %p41 = scmp.eq.s32.totalorder %s21, 0
      %p42 = por %p40, %p41
      %p43 = scmp.ne.s32.totalorder %s29, %s30
      %p44 = scmp.eq.s32.totalorder %s22, 1
      %p45 = por %p43, %p44
      %p47 = scmp.ne.s32.totalorder %s30, %s46
      %p48 = scmp.eq.s32.totalorder %s22, 0
      %p49 = por %p47, %p48
      %s51 = sadd.s32 %s50, 1
      %p54 = scmp.eq.s32.totalorder %s16, 1
      %p55 = scmp.ne.s32.totalorder %s50, %s52
      %p56 = scmp.eq.s32.totalorder %s16, 0
      %p57 = por %p55, %p56
      %p58 = scmp.ne.s32.totalorder %s50, %s52
      %p59 = scmp.eq.s32.totalorder %s21, 1
      %p60 = por %p58, %p59
      %p61 = scmp.ne.s32.totalorder %s52, %s53
      %p62 = scmp.eq.s32.totalorder %s21, 0
      %p63 = por %p61, %p62
      %p64 = scmp.ne.s32.totalorder %s52, %s53
      %p65 = scmp.eq.s32.totalorder %s22, 1
      %p66 = por %p64, %p65
      %p68 = scmp.ne.s32.totalorder %s53, %s67
      %p69 = scmp.eq.s32.totalorder %s22, 0
      %p70 = por %p68, %p69
      %s72 = sadd.s32 %s71, 1
      %p75 = scmp.eq.s32.totalorder %s16, 1
      %p76 = scmp.ne.s32.totalorder %s71, %s73
      %p77 = scmp.eq.s32.totalorder %s16, 0
      %p78 = por %p76, %p77
      %p79 = scmp.ne.s32.totalorder %s71, %s73
      %p80 = scmp.eq.s32.totalorder %s21, 1
      %p81 = por %p79, %p80
      %p82 = scmp.ne.s32.totalorder %s73, %s74
      %p83 = scmp.eq.s32.totalorder %s21, 0
      %p84 = por %p82, %p83
      %p85 = scmp.ne.s32.totalorder %s73, %s74
      %p86 = scmp.eq.s32.totalorder %s22, 1
      %p87 = por %p85, %p86
      %p89 = scmp.ne.s32.totalorder %s74, %s88
      %p90 = scmp.eq.s32.totalorder %s22, 0
      %p91 = por %p89, %p90
      %s93 = sadd.s32 %s92, 1
      %p96 = scmp.eq.s32.totalorder %s16, 1
      %p97 = scmp.ne.s32.totalorder %s92, %s94
      %p98 = scmp.eq.s32.totalorder %s16, 0
      %p99 = por %p97, %p98
      %p100 = scmp.ne.s32.totalorder %s92, %s94
      %p101 = scmp.eq.s32.totalorder %s21, 1
      %p102 = por %p100, %p101
      %p103 = scmp.ne.s32.totalorder %s94, %s95
      %p104 = scmp.eq.s32.totalorder %s21, 0
      %p105 = por %p103, %p104
      %p106 = scmp.ne.s32.totalorder %s94, %s95
      %p107 = scmp.eq.s32.totalorder %s22, 1
      %p108 = por %p106, %p107
      %p110 = scmp.ne.s32.totalorder %s95, %s109
      %p111 = scmp.eq.s32.totalorder %s22, 0
      %p112 = por %p110, %p111
      %s114 = sadd.s32 %s113, 1
      %p117 = scmp.eq.s32.totalorder %s16, 1
      %p118 = scmp.ne.s32.totalorder %s113, %s115
      %p119 = scmp.eq.s32.totalorder %s16, 0
      %p120 = por %p118, %p119
      %p121 = scmp.ne.s32.totalorder %s113, %s115
      %p122 = scmp.eq.s32.totalorder %s21, 1
      %p123 = por %p121, %p122
      %p124 = scmp.ne.s32.totalorder %s115, %s116
      %p125 = scmp.eq.s32.totalorder %s21, 0
      %p126 = por %p124, %p125
      %p127 = scmp.ne.s32.totalorder %s115, %s116
      %p128 = scmp.eq.s32.totalorder %s22, 1
      %p129 = por %p127, %p128
      %p131 = scmp.ne.s32.totalorder %s116, %s130
      %p132 = scmp.eq.s32.totalorder %s22, 0
      %p133 = por %p131, %p132
      %s134 = ssub.s32 %s16, %s23
      %p135 = scmp.eq.s32.totalorder %s134, 0
      %s137 = sadd.s32 %s136, 1
      %s138 = scalar_select %p135, %s136, %s137
      %p141 = pneg %p135
      %p142 = scmp.eq.s32.totalorder %s16, 1
      %p143 = por %p141, %p142
      %p144 = scmp.ne.s32.totalorder %s136, %s139
      %p145 = scmp.eq.s32.totalorder %s16, 0
      %p146 = por %p144, %p145
      %p147 = scmp.ne.s32.totalorder %s136, %s139
      %p148 = scmp.eq.s32.totalorder %s21, 1
      %p149 = por %p147, %p148
      %p150 = scmp.ne.s32.totalorder %s139, %s140
      %p151 = scmp.eq.s32.totalorder %s21, 0
      %p152 = por %p150, %p151
      %p153 = scmp.ne.s32.totalorder %s139, %s140
      %p154 = scmp.eq.s32.totalorder %s22, 1
      %p155 = por %p153, %p154
      %p157 = scmp.ne.s32.totalorder %s140, %s156
      %p158 = scmp.eq.s32.totalorder %s22, 0
      %p159 = por %p157, %p158
      %p160 = scmp.le.s32.totalorder 1, %s16
      %p161 = scmp.lt.s32.totalorder %s16, 3
      %p162 = pnand %p160, %p161
      %p163 = pneg %p162
      // Predicated region
      $region9: #{tpu_custom_call.1} parent=5 // pred_check
        _
      $region10: #{tpu_custom_call.1} parent=5 // pred_check_branch
        %165 = sbr.rel (%p162) target = $region12
      $region11: #{tpu_custom_call.1} parent=5 // pred_region
        %s166 = ssub.s32 %s16, 1
        // Predicated region
        $region13: #{tpu_custom_call.1} parent=11 // pred_check
          %p167 = pneg %p63
        $region14: #{tpu_custom_call.1} parent=11 // pred_check_branch
          %169 = sbr.rel (%p167) target = $region16
        $region15: #{tpu_custom_call.1} parent=11 // pred_region
          %s171 = ssub.s32 4096, 4096
          %172 = vsyncadd [#allocation6], %s171
          %s173 = sshll.u32 [#allocation5], 4
          %s174 = int_to_ptr.vmem [resolvable:$true] %s173
          %179 = dma.hbm_to_vmem [thread:$0]  %s1, 4096, %s174, [#allocation6], 128, 128, 8
        $region16: #{tpu_custom_call.1} parent=11 // pred_fallthru
          _
        // Predicated region
        $region17: #{tpu_custom_call.1} parent=11 // pred_check
          %p180 = pneg %p84
        $region18: #{tpu_custom_call.1} parent=11 // pred_check_branch
          %182 = sbr.rel (%p180) target = $region20
        $region19: #{tpu_custom_call.1} parent=11 // pred_region
          _
        $region20: #{tpu_custom_call.1} parent=11 // pred_fallthru
          _
        // Predicated region
        $region21: #{tpu_custom_call.1} parent=11 // pred_check
          %p183 = pneg %p105
        $region22: #{tpu_custom_call.1} parent=11 // pred_check_branch
          %185 = sbr.rel (%p183) target = $region24
        $region23: #{tpu_custom_call.1} parent=11 // pred_region
          _
        $region24: #{tpu_custom_call.1} parent=11 // pred_fallthru
          _
        // Predicated region
        $region25: #{tpu_custom_call.1} parent=11 // pred_check
          %p186 = pneg %p126
        $region26: #{tpu_custom_call.1} parent=11 // pred_check_branch
          %188 = sbr.rel (%p186) target = $region28
        $region27: #{tpu_custom_call.1} parent=11 // pred_region
          _
        $region28: #{tpu_custom_call.1} parent=11 // pred_fallthru
          _
      $region12: #{tpu_custom_call.1} parent=5 // pred_fallthru
        _
      %p189 = scmp.lt.s32.totalorder %s16, 2
      // Predicated region
      $region29: #{tpu_custom_call.1} parent=5 // pred_check
        %p190 = pneg %p189
      $region30: #{tpu_custom_call.1} parent=5 // pred_check_branch
        %192 = sbr.rel (%p190) target = $region32
      $region31: #{tpu_custom_call.1} parent=5 // pred_region
        // Predicated region
        $region33: #{tpu_custom_call.1} parent=31 // pred_check
          %p193 = pneg %p36
        $region34: #{tpu_custom_call.1} parent=31 // pred_check_branch
          %195 = sbr.rel (%p193) target = $region36
        $region35: #{tpu_custom_call.1} parent=31 // pred_region
          %s196 = sand.u32 %s26, 1
          %s197 = scalar_lea.sflag [#allocation4], %s196
          %s198 = sand.u32 %s26, 1
          %s199 = smul.addr %s198, 64
          %s200 = scalar_lea.vmem [#allocation3], %s199
          %s201 = smul.u32 4, %s16
          %s203 = ssub.s32 1024, 1024
          %204 = vsyncadd %s197, %s203
          %s205 = smul.addr %s201, 2
          %s206 = smul.addr %s205, 128
          %s207 = scalar_lea.hbm %s0, %s206
          %s208 = sshll.u32 %s200, 4
          %s209 = int_to_ptr.vmem [resolvable:$true] %s208
          %214 = dma.hbm_to_vmem [thread:$0]  %s207, 1024, %s209, %s197, 256, 256, 16
        $region36: #{tpu_custom_call.1} parent=31 // pred_fallthru
          _
      $region32: #{tpu_custom_call.1} parent=5 // pred_fallthru
        _
      %p215 = scmp.le.s32.totalorder 1, %s16
      %p216 = scmp.lt.s32.totalorder %s16, 3
      %p217 = pnand %p215, %p216
      %p218 = pneg %p217
      // Predicated region
      $region37: #{tpu_custom_call.1} parent=5 // pred_check
        _
      $region38: #{tpu_custom_call.1} parent=5 // pred_check_branch
        %220 = sbr.rel (%p217) target = $region40
      $region39: #{tpu_custom_call.1} parent=5 // pred_region
        %s221 = ssub.s32 %s16, 1
        %s222 = sand.u32 %s29, 1
        %s223 = scalar_lea.sflag [#allocation4], %s222
        %s224 = sand.u32 %s29, 1
        %s225 = smul.addr %s224, 64
        %s226 = scalar_lea.vmem [#allocation3], %s225
        // Predicated region
        $region41: #{tpu_custom_call.1} parent=39 // pred_check
          %p227 = pneg %p42
        $region42: #{tpu_custom_call.1} parent=39 // pred_check_branch
          %229 = sbr.rel (%p227) target = $region44
        $region43: #{tpu_custom_call.1} parent=39 // pred_region
          %230 = dma.done %s223, 1024
        $region44: #{tpu_custom_call.1} parent=39 // pred_fallthru
          _
        // Predicated region
        $region45: #{tpu_custom_call.1} parent=39 // pred_check
          %p231 = pneg %p63
        $region46: #{tpu_custom_call.1} parent=39 // pred_check_branch
          %233 = sbr.rel (%p231) target = $region48
        $region47: #{tpu_custom_call.1} parent=39 // pred_region
          %234 = dma.done [#allocation6], 4096
        $region48: #{tpu_custom_call.1} parent=39 // pred_fallthru
          _
        %s235 = sand.u32 %s29, 1
        %s236 = scalar_lea.sflag [#allocation4], %s235
        %s237 = sand.u32 %s29, 1
        %s238 = smul.addr %s237, 64
        %s239 = scalar_lea.vmem [#allocation3], %s238
        %p240 = pneg %p42
        %p241 = pneg %p39
        %p242 = pneg %p63
        %p243 = pneg %p60
        %p244 = pneg %p84
        %p245 = pneg %p81
        %p246 = pneg %p105
        %p247 = pneg %p102
        %p248 = pneg %p126
        %p249 = pneg %p123
        %p250 = pneg %p152
        %p251 = pneg %p149
        %s252 = smul.u32 4, %s21
        %p253 = scmp.lt.s32.totalorder %s252, 7
        %s254 = scalar_select %p253, %s252, 7
        %s255 = smul.addr %s254, 8
        %s256 = scalar_lea.vmem %s5, %s255
        %s257 = smul.u32 4, %s21
        %s258 = smul.u32 4, %s21
        %p259 = scmp.lt.s32.totalorder %s258, 7
        %s260 = scalar_select %p259, %s258, 7
        %s261 = smul.addr %s260, 8
        %s262 = scalar_lea.vmem %s5, %s261
        %s263 = smul.u32 4, %s21
        %v264 = vld [vmem:[%s226] sm:$0xff]
        %v265 = vld [vmem:[%s226 + $0x8] sm:$0xff]
        %v266 = vld [vmem:[%s226 + $0x10] sm:$0xff]
        %v267 = vld [vmem:[%s226 + $0x18] sm:$0xff]
        %v268 = vld [vmem:[%s226 + $0x20] sm:$0xff]
        %v269 = vld [vmem:[%s226 + $0x28] sm:$0xff]
        %v270 = vld [vmem:[%s226 + $0x30] sm:$0xff]
        %v271 = vld [vmem:[%s226 + $0x38] sm:$0xff]
        %v272 = vld [vmem:[#allocation5] sm:$0xff]
        %v273 = vld [vmem:[#allocation5 + $0x8] sm:$0xff]
        %v274 = vld [vmem:[#allocation5 + $0x10] sm:$0xff]
        %v275 = vld [vmem:[#allocation5 + $0x18] sm:$0xff]
        %v276 = vld [vmem:[#allocation5 + $0x20] sm:$0xff]
        %v277 = vld [vmem:[#allocation5 + $0x28] sm:$0xff]
        %v278 = vld [vmem:[#allocation5 + $0x30] sm:$0xff]
        %v279 = vld [vmem:[#allocation5 + $0x38] sm:$0xff]
        %v280 = vld [vmem:[#allocation5 + $0x40] sm:$0xff]
        %v281 = vld [vmem:[#allocation5 + $0x48] sm:$0xff]
        %v282 = vld [vmem:[#allocation5 + $0x50] sm:$0xff]
        %v283 = vld [vmem:[#allocation5 + $0x58] sm:$0xff]
        %v284 = vld [vmem:[#allocation5 + $0x60] sm:$0xff]
        %v285 = vld [vmem:[#allocation5 + $0x68] sm:$0xff]
        %v286 = vld [vmem:[#allocation5 + $0x70] sm:$0xff]
        %v287 = vld [vmem:[#allocation5 + $0x78] sm:$0xff]
        %v288 = vld [vmem:[#allocation5 + $0x80] sm:$0xff]
        %v289 = vld [vmem:[#allocation5 + $0x88] sm:$0xff]
        %v290 = vld [vmem:[#allocation5 + $0x90] sm:$0xff]
        %v291 = vld [vmem:[#allocation5 + $0x98] sm:$0xff]
        %v292 = vld [vmem:[#allocation5 + $0xa0] sm:$0xff]
        %v293 = vld [vmem:[#allocation5 + $0xa8] sm:$0xff]
        %v294 = vld [vmem:[#allocation5 + $0xb0] sm:$0xff]
        %v295 = vld [vmem:[#allocation5 + $0xb8] sm:$0xff]
        %v296 = vld [vmem:[#allocation5 + $0xc0] sm:$0xff]
        %v297 = vld [vmem:[#allocation5 + $0xc8] sm:$0xff]
        %v298 = vld [vmem:[#allocation5 + $0xd0] sm:$0xff]
        %v299 = vld [vmem:[#allocation5 + $0xd8] sm:$0xff]
        %v300 = vld [vmem:[#allocation5 + $0xe0] sm:$0xff]
        %v301 = vld [vmem:[#allocation5 + $0xe8] sm:$0xff]
        %v302 = vld [vmem:[#allocation5 + $0xf0] sm:$0xff]
        %v303 = vld [vmem:[#allocation5 + $0xf8] sm:$0xff]
        %v304 = vld [vmem:[%s2] sm:$0x1]
        %v306 = vlaneseq
        %v307 = vshrl.u32 %v306, 7
        %v308 = vsub.s32 0, %v307
        %v309 = vrot.slane %v304, %v308
        %311 = vmatprep.subr.mxu0 0.0
        %312 = vmatpush1.msra.mxu0 %v272
        %313 = vmatprep.subr.mxu0 0.0
        %314 = vmatpush1.msra.mxu0 %v273
        %315 = vmatprep.subr.mxu0 0.0
        %316 = vmatpush1.msra.mxu0 %v274
        %317 = vmatprep.subr.mxu0 0.0
        %318 = vmatpush1.msra.mxu0 %v275
        %319 = vmatprep.subr.mxu0 0.0
        %320 = vmatpush1.msra.mxu0 %v276
        %321 = vmatprep.subr.mxu0 0.0
        %322 = vmatpush1.msra.mxu0 %v277
        %323 = vmatprep.subr.mxu0 0.0
        %324 = vmatpush1.msra.mxu0 %v278
        %325 = vmatprep.subr.mxu0 0.0
        %326 = vmatpush1.msra.mxu0 %v279
        %327 = vmatprep.subr.mxu0 0.0
        %328 = vmatpush1.msra.mxu0 %v280
        %329 = vmatprep.subr.mxu0 0.0
        %330 = vmatpush1.msra.mxu0 %v281
        %331 = vmatprep.subr.mxu0 0.0
        %332 = vmatpush1.msra.mxu0 %v282
        %333 = vmatprep.subr.mxu0 0.0
        %334 = vmatpush1.msra.mxu0 %v283
        %335 = vmatprep.subr.mxu0 0.0
        %336 = vmatpush1.msra.mxu0 %v284
        %337 = vmatprep.subr.mxu0 0.0
        %338 = vmatpush1.msra.mxu0 %v285
        %339 = vmatprep.subr.mxu0 0.0
        %340 = vmatpush1.msra.mxu0 %v286
        %341 = vmatprep.subr.mxu0 0.0
        %342 = vmatpush1.msra.mxu0 %v287
        %343 = vmatprep.subr.mxu0 0.0
        %344 = vmatpush1.msra.mxu0 %v288
        %345 = vmatprep.subr.mxu0 0.0
        %346 = vmatpush1.msra.mxu0 %v289
        %347 = vmatprep.subr.mxu0 0.0
        %348 = vmatpush1.msra.mxu0 %v290
        %349 = vmatprep.subr.mxu0 0.0
        %350 = vmatpush1.msra.mxu0 %v291
        %351 = vmatprep.subr.mxu0 0.0
        %352 = vmatpush1.msra.mxu0 %v292
        %353 = vmatprep.subr.mxu0 0.0
        %354 = vmatpush1.msra.mxu0 %v293
        %355 = vmatprep.subr.mxu0 0.0
        %356 = vmatpush1.msra.mxu0 %v294
        %357 = vmatprep.subr.mxu0 0.0
        %358 = vmatpush1.msra.mxu0 %v295
        %359 = vmatprep.subr.mxu0 0.0
        %360 = vmatpush1.msra.mxu0 %v296
        %361 = vmatprep.subr.mxu0 0.0
        %362 = vmatpush1.msra.mxu0 %v297
        %363 = vmatprep.subr.mxu0 0.0
        %364 = vmatpush1.msra.mxu0 %v298
        %365 = vmatprep.subr.mxu0 0.0
        %366 = vmatpush1.msra.mxu0 %v299
        %367 = vmatprep.subr.mxu0 0.0
        %368 = vmatpush1.msra.mxu0 %v300
        %369 = vmatprep.subr.mxu0 0.0
        %370 = vmatpush1.msra.mxu0 %v301
        %371 = vmatprep.subr.mxu0 0.0
        %372 = vmatpush1.msra.mxu0 %v302
        %373 = vmatprep.subr.mxu0 0.0
        %374 = vmatpush1.msra.mxu0 %v303
        %375 = vmatprep.mubr.f32.mxu0 %v265
        %376 = vmatmul.mubr.f32.gmra.mrb[0].mxu0 %v264
        %v377 = vpop.f32.mrb[0].mxu0
        %v378 = vadd.f32 %v309, %v377
        %v379 = vpop.f32.mrb[0].mxu0
        %380 = vmatprep.mubr.f32.mxu0 %v267
        %381 = vmatmul.mubr.f32.gmra.mrb[0].mxu0 %v266
        %v382 = vpop.f32.mrb[0].mxu0
        %v383 = vadd.f32 %v309, %v382
        %v384 = vpop.f32.mrb[0].mxu0
        %385 = vmatprep.mubr.f32.mxu0 %v269
        %386 = vmatmul.mubr.f32.gmra.mrb[0].mxu0 %v268
        %v387 = vpop.f32.mrb[0].mxu0
        %v388 = vadd.f32 %v309, %v387
        %v389 = vpop.f32.mrb[0].mxu0
        %390 = vmatprep.mubr.f32.mxu0 %v271
        %391 = vmatmul.mubr.f32.gmra.mrb[0].mxu0 %v270
        %v392 = vpop.f32.mrb[0].mxu0
        %v393 = vadd.f32 %v309, %v392
        %v394 = vpop.f32.mrb[0].mxu0
        %395 = vdwg.mxu0
        %v396 = vmax.f32 %v378, 0.0
        %v397 = vmax.f32 %v383, 0.0
        %v398 = vmax.f32 %v388, 0.0
        %v399 = vmax.f32 %v393, 0.0
        %v400 = vld [vmem:[%s3] sm:$0x1]
        %v402 = vlaneseq
        %v403 = vshrl.u32 %v402, 7
        %v404 = vsub.s32 0, %v403
        %v405 = vrot.slane %v400, %v404
        %v407 = vmul.f32 %v396, %v405
        %v408 = vmul.f32 %v397, %v405
        %v409 = vmul.f32 %v398, %v405
        %v410 = vmul.f32 %v399, %v405
        %411 = vadd.xlane.f32.xlu0 %v407
        %v412 = vpop.xlane.xlu0 %411
        %413 = vadd.xlane.f32.xlu0 %v408
        %v414 = vpop.xlane.xlu0 %413
        %415 = vadd.xlane.f32.xlu0 %v409
        %v416 = vpop.xlane.xlu0 %415
        %417 = vadd.xlane.f32.xlu0 %v410
        %v418 = vpop.xlane.xlu0 %417
        %s419 = sld [smem:[#allocation2]]
        %v420 = vstv %s419
        %v421 = vadd.f32 %v412, %v420
        %v422 = vadd.f32 %v414, %v420
        %v423 = vadd.f32 %v416, %v420
        %v424 = vadd.f32 %v418, %v420
        %vm425 = vcmask 7168
        %426 = vst.msk [vmem:[%s262] sm:$0xff] %vm425, %v421
        %427 = vst.msk [vmem:[%s262 + $0x8] sm:$0xff] %vm425, %v422
        %428 = vst.msk [vmem:[%s262 + $0x10] sm:$0xff] %vm425, %v423
        %429 = vst.msk [vmem:[%s262 + $0x18] sm:$0xff] %vm425, %v424
        %s430 = smul.u32 4, %s21
        %p431 = scmp.lt.s32.totalorder %s430, 7
        %s432 = scalar_select %p431, %s430, 7
        %s433 = smul.addr %s432, 8
        %s434 = scalar_lea.vmem %s5, %s433
        // Predicated region
        $region49: #{tpu_custom_call.1} parent=39 // pred_check
          %p435 = pneg %p149
        $region50: #{tpu_custom_call.1} parent=39 // pred_check_branch
          %437 = sbr.rel (%p435) target = $region52
        $region51: #{tpu_custom_call.1} parent=39 // pred_region
          %s438 = smul.u32 4, %s21
        $region52: #{tpu_custom_call.1} parent=39 // pred_fallthru
          _
      $region40: #{tpu_custom_call.1} parent=5 // pred_fallthru
        _
      %p439 = scmp.le.s32.totalorder 2, %s16
      // Predicated region
      $region53: #{tpu_custom_call.1} parent=5 // pred_check
        %p440 = pneg %p439
      $region54: #{tpu_custom_call.1} parent=5 // pred_check_branch
        %442 = sbr.rel (%p440) target = $region56
      $region55: #{tpu_custom_call.1} parent=5 // pred_region
        %s443 = ssub.s32 %s16, 2
        // Predicated region
        $region57: #{tpu_custom_call.1} parent=55 // pred_check
          %p444 = pneg %p155
        $region58: #{tpu_custom_call.1} parent=55 // pred_check_branch
          %446 = sbr.rel (%p444) target = $region60
        $region59: #{tpu_custom_call.1} parent=55 // pred_region
          %s447 = smul.u32 4, %s22
          %p448 = scmp.lt.s32.totalorder %s447, 7
          %s449 = scalar_select %p448, %s447, 7
          %s450 = smul.addr %s449, 8
          %s451 = scalar_lea.vmem %s5, %s450
        $region60: #{tpu_custom_call.1} parent=55 // pred_fallthru
          _
      $region56: #{tpu_custom_call.1} parent=5 // pred_fallthru
        _
    $region6: #{tpu_custom_call.1} parent=1 // loop_footer
      %s20 = sadd.s32 1, %s16
    $region7: #{tpu_custom_call.1} parent=1 // loop_footer_branch
      %15 = sbr.rel target = $region3
    $region8: #{tpu_custom_call.1} parent=1 // loop_exit
      _
    %452 = vsyncpa [#allocation4], 1
    %s453 = scalar_lea.sflag [#allocation4], 1
    %454 = vsyncpa %s453, 1
    %455 = vsyncpa [#allocation6], 1

</llo_original>
